<compile_context>
chip_gen: v7x
topology: tpu7x:2x2x1
jax: 0.10.0
libtpu: 0.0.40
codegen_flags: <defaults>
</compile_context>

<pallas_src>
import jax
import jax.numpy as jnp
from jax.experimental import pallas as pl
from jax.experimental.pallas import tpu as pltpu


def _make_loss_kernel(batch, tile_b, need_mask):
    inv_b = 1.0 / float(batch)

    def kernel(y_pred_ref, y_ref, x_pred_ref, x_ref, sx_ref, sy_ref, out_ref):
        i = pl.program_id(0)

        @pl.when(i == 0)
        def _init():
            out_ref[...] = jnp.zeros_like(out_ref)

        # Upcast after the DMA (inputs may be streamed as bf16/f16).
        x = x_ref[...].astype(jnp.float32)
        xp = x_pred_ref[...].astype(jnp.float32)
        y = y_ref[...].astype(jnp.float32)
        yp = y_pred_ref[...].astype(jnp.float32)
        sx = sx_ref[...].astype(jnp.float32)   # (tb|1, Dx|1) - broadcasts below
        sy = sy_ref[...].astype(jnp.float32)   # (tb|1, Dy|1)

        dx = x - xp
        dy = y - yp
        inv_sx2 = pl.reciprocal(sx * sx, approx=False)
        inv_sy2 = pl.reciprocal(sy * sy, approx=False)
        tx = dx * dx * inv_sx2                 # (tile_b, Dx)
        ty = dy * dy * inv_sy2                 # (tile_b, Dy)

        if need_mask:
            rows = i * tile_b + jax.lax.broadcasted_iota(
                jnp.int32, (tile_b, 1), 0)
            valid = rows < batch
            tx = jnp.where(valid, tx, 0.0)
            ty = jnp.where(valid, ty, 0.0)

        out_ref[...] += jnp.sum(tx) + jnp.sum(ty)

        @pl.when(i == pl.num_programs(0) - 1)
        def _finish():
            out_ref[...] = out_ref[...] * jnp.float32(inv_b)

    return kernel


def _keep_or_f32(a):
    a = jnp.asarray(a)
    if a.dtype in (jnp.bfloat16, jnp.float16):
        return a                       # stream narrow, upcast inside the kernel
    return a.astype(jnp.float32)


def _prep_sigma(sigma, batch, dim):
    """Normalize sigma to a 2-D array at its native broadcast rank."""
    s = _keep_or_f32(sigma)
    if s.ndim == 0:
        return s.reshape(1, 1)
    if s.ndim == 1:
        return s.reshape(1, -1)                      # per-feature
    if s.ndim == 2 and (s.shape[0] in (1, batch)) and (s.shape[1] in (1, dim)):
        return s                                     # already 2-D, keep rank
    # Anything exotic: fall back to a full (B, D) stream.
    return jnp.broadcast_to(s, (batch, dim))


def _auto_tile_b(batch, dx, dy, sx_shape, sy_shape,
                 budget_bytes=12 * 1024 * 1024):
    # Keep (streamed bytes per step) * 2 (double buffering) under the budget,
    # which stays well inside scoped VMEM on v5e/v6e/v7x (64 MiB on v7x).
    sx_row = sx_shape[1] if sx_shape[0] == batch else 0
    sy_row = sy_shape[1] if sy_shape[0] == batch else 0
    row_bytes = 4 * (2 * dx + 2 * dy + sx_row + sy_row)
    tb = budget_bytes // (2 * max(row_bytes, 1))
    tb = max(8, (tb // 8) * 8)
    if tb >= batch:
        return batch                   # single step, full-batch block
    return int(tb)


def loss_od(y_pred, y, x_pred, x, sigma_x, sigma_y, *, tile_b=None):
    """Pallas implementation of Loss_OD.forward."""
    x = _keep_or_f32(x)
    x_pred = _keep_or_f32(x_pred)
    y = _keep_or_f32(y)
    y_pred = _keep_or_f32(y_pred)

    B, Dx = x.shape
    By, Dy = y.shape
    assert B == By, "batch dims must match"

    sx = _prep_sigma(sigma_x, B, Dx)
    sy = _prep_sigma(sigma_y, B, Dy)

    if tile_b is None:
        tile_b = _auto_tile_b(B, Dx, Dy, sx.shape, sy.shape)
    if tile_b >= B:
        tile_b = B
    elif tile_b % 8 != 0:
        raise ValueError("tile_b must equal the batch or be a multiple of 8")

    num_tiles = pl.cdiv(B, tile_b)
    need_mask = (B % tile_b) != 0

    def batch_spec(dim):
        # Tiled along the batch axis.
        return pl.BlockSpec((tile_b, dim), lambda i: (i, 0))

    def sigma_spec(shape):
        # Native-rank sigma block: batch-tiled only if it actually has a batch
        # axis; otherwise a small resident block with a constant index_map.
        b_blk = tile_b if shape[0] == B else 1
        return pl.BlockSpec((b_blk, shape[1]), lambda i: (i if b_blk == tile_b else 0, 0))

    in_specs = [
        batch_spec(Dy),          # y_pred
        batch_spec(Dy),          # y
        batch_spec(Dx),          # x_pred
        batch_spec(Dx),          # x
        sigma_spec(sx.shape),    # sigma_x
        sigma_spec(sy.shape),    # sigma_y
    ]
    # Constant index_map -> resident accumulator, written back once at the end.
    out_spec = pl.BlockSpec((1, 1), lambda i: (0, 0))

    streamed_bytes = sum(int(a.size) * a.dtype.itemsize
                         for a in (y_pred, y, x_pred, x, sx, sy)) + 4
    cost = pl.CostEstimate(flops=7 * B * (Dx + Dy),
                           transcendentals=0,
                           bytes_accessed=int(streamed_bytes))

    kernel = _make_loss_kernel(B, tile_b, need_mask)

    out = pl.pallas_call(
        kernel,
        out_shape=jax.ShapeDtypeStruct((1, 1), jnp.float32),
        grid_spec=pltpu.PrefetchScalarGridSpec(
            num_scalar_prefetch=0,
            grid=(num_tiles,),
            in_specs=in_specs,
            out_specs=out_spec,
        ),
        compiler_params=pltpu.CompilerParams(
            dimension_semantics=("arbitrary",),      # output is an accumulator
            vmem_limit_bytes=40 * 1024 * 1024,
        ),
        cost_estimate=cost,
    )(y_pred, y, x_pred, x, sx, sy)
    return out[0, 0]


if __name__ == "__main__":
    key = jax.random.PRNGKey(0)
    k1, k2, k3, k4, k5, k6 = jax.random.split(key, 6)

    B, Dx, Dy = 13, 48, 64        # odd batch -> exercises the masked last tile
    x = jax.random.normal(k1, (B, Dx), jnp.float32)
    x_pred = jax.random.normal(k2, (B, Dx), jnp.float32)
    y = jax.random.normal(k3, (B, Dy), jnp.float32)
    y_pred = jax.random.normal(k4, (B, Dy), jnp.float32)
    sigma_x_full = jax.random.uniform(k5, (B, Dx), jnp.float32, 0.5, 2.0)
    sigma_y_full = jax.random.uniform(k6, (B, Dy), jnp.float32, 0.5, 2.0)

    def ref_loss(sx, sy):
        return (((x - x_pred) ** 2 / sx ** 2).sum(1)
                + ((y - y_pred) ** 2 / sy ** 2).sum(1)).mean()

    # Case 1: full (B, D) sigmas, tiled batch grid (tile_b=8 -> 2 grid steps,
    # masked last tile).
    out1 = loss_od(y_pred, y, x_pred, x, sigma_x_full, sigma_y_full, tile_b=8)
    jax.block_until_ready(out1)
    ref1 = ref_loss(sigma_x_full, sigma_y_full)
    assert jnp.allclose(out1, ref1, rtol=1e-5, atol=1e-5), (out1, ref1)

    # Case 2: broadcasting sigmas (per-feature sigma_x, scalar sigma_y) kept at
    # native rank -> small resident blocks, no materialized (B, D) copies.
    sigma_x_feat = jax.random.uniform(k5, (Dx,), jnp.float32, 0.5, 2.0)
    sigma_y_scalar = jnp.float32(1.3)
    out2 = loss_od(y_pred, y, x_pred, x, sigma_x_feat, sigma_y_scalar)
    jax.block_until_ready(out2)
    ref2 = ref_loss(sigma_x_feat[None, :], sigma_y_scalar)
    assert jnp.allclose(out2, ref2, rtol=1e-5, atol=1e-5), (out2, ref2)

    # Case 3: per-sample sigmas (B, 1), streamed as (tile_b, 1) blocks.
    sigma_x_col = jax.random.uniform(k5, (B, 1), jnp.float32, 0.5, 2.0)
    sigma_y_col = jax.random.uniform(k6, (B, 1), jnp.float32, 0.5, 2.0)
    out3 = loss_od(y_pred, y, x_pred, x, sigma_x_col, sigma_y_col, tile_b=8)
    jax.block_until_ready(out3)
    ref3 = ref_loss(sigma_x_col, sigma_y_col)
    assert jnp.allclose(out3, ref3, rtol=1e-5, atol=1e-5), (out3, ref3)

    print("KERNEL_OK")
</pallas_src>

<mosaic_0001>
module attributes {stable_mosaic.version = 11 : i64} {
  func.func @kernel(%arg0: i32, %arg1: memref<8x64xf32, #tpu.memory_space<vmem>>, %arg2: memref<8x64xf32, #tpu.memory_space<vmem>>, %arg3: memref<8x48xf32, #tpu.memory_space<vmem>>, %arg4: memref<8x48xf32, #tpu.memory_space<vmem>>, %arg5: memref<8x48xf32, #tpu.memory_space<vmem>>, %arg6: memref<8x64xf32, #tpu.memory_space<vmem>>, %arg7: memref<1x1xf32, #tpu.memory_space<vmem>>) attributes {dimension_semantics = [#tpu.dimension_semantics<arbitrary>], iteration_bounds = array<i64: 2>, scalar_prefetch = 0 : i64, scratch_operands = 0 : i64, tpu.core_type = #tpu.core_type<tc>, window_params = [{transform_indices = @transform_0, window_bounds = array<i64: 8, 64>}, {transform_indices = @transform_1, window_bounds = array<i64: 8, 64>}, {transform_indices = @transform_2, window_bounds = array<i64: 8, 48>}, {transform_indices = @transform_3, window_bounds = array<i64: 8, 48>}, {transform_indices = @transform_4, window_bounds = array<i64: 8, 48>}, {transform_indices = @transform_5, window_bounds = array<i64: 8, 64>}, {pipeline_mode = #tpu.pipeline_mode<synchronous>, transform_indices = @transform_6, window_bounds = array<i64: 1, 1>}]} {
    %c0_i32 = arith.constant 0 : i32
    %0 = arith.cmpi eq, %arg0, %c0_i32 : i32
    %1 = arith.extui %0 : i1 to i32
    %c0_i32_0 = arith.constant 0 : i32
    %2 = arith.cmpi ne, %1, %c0_i32_0 : i32
    scf.if %2 {
      %cst_20 = arith.constant 0.000000e+00 : f32
      %49 = vector.broadcast %cst_20 : f32 to vector<1x1xf32>
      %c0_21 = arith.constant 0 : index
      %c0_22 = arith.constant 0 : index
      %50 = vector.load %arg7[%c0_21, %c0_22] : memref<1x1xf32, #tpu.memory_space<vmem>>, vector<1x1xf32>
      tpu.vector_store %arg7[%c0_21, %c0_22], %49 {strides = array<i32>} : memref<1x1xf32, #tpu.memory_space<vmem>>, vector<1x1xf32>,
    } else {
    }
    %c0 = arith.constant 0 : index
    %c0_1 = arith.constant 0 : index
    %3 = vector.load %arg4[%c0, %c0_1] : memref<8x48xf32, #tpu.memory_space<vmem>>, vector<8x48xf32>
    %c0_2 = arith.constant 0 : index
    %c0_3 = arith.constant 0 : index
    %4 = vector.load %arg3[%c0_2, %c0_3] : memref<8x48xf32, #tpu.memory_space<vmem>>, vector<8x48xf32>
    %c0_4 = arith.constant 0 : index
    %c0_5 = arith.constant 0 : index
    %5 = vector.load %arg2[%c0_4, %c0_5] : memref<8x64xf32, #tpu.memory_space<vmem>>, vector<8x64xf32>
    %c0_6 = arith.constant 0 : index
    %c0_7 = arith.constant 0 : index
    %6 = vector.load %arg1[%c0_6, %c0_7] : memref<8x64xf32, #tpu.memory_space<vmem>>, vector<8x64xf32>
    %c0_8 = arith.constant 0 : index
    %c0_9 = arith.constant 0 : index
    %7 = vector.load %arg5[%c0_8, %c0_9] : memref<8x48xf32, #tpu.memory_space<vmem>>, vector<8x48xf32>
    %c0_10 = arith.constant 0 : index
    %c0_11 = arith.constant 0 : index
    %8 = vector.load %arg6[%c0_10, %c0_11] : memref<8x64xf32, #tpu.memory_space<vmem>>, vector<8x64xf32>
    %9 = arith.subf %3, %4 : vector<8x48xf32>
    %10 = arith.subf %5, %6 : vector<8x64xf32>
    %11 = arith.mulf %7, %7 : vector<8x48xf32>
    %12 = tpu.reciprocal %11 : vector<8x48xf32> -> vector<8x48xf32>
    %13 = arith.mulf %8, %8 : vector<8x64xf32>
    %14 = tpu.reciprocal %13 : vector<8x64xf32> -> vector<8x64xf32>
    %15 = arith.mulf %9, %9 : vector<8x48xf32>
    %16 = arith.mulf %15, %12 : vector<8x48xf32>
    %17 = arith.mulf %10, %10 : vector<8x64xf32>
    %18 = arith.mulf %17, %14 : vector<8x64xf32>
    %c8_i32 = arith.constant 8 : i32
    %19 = arith.muli %arg0, %c8_i32 : i32
    %20 = tpu.iota {dimensions = array<i32: 0>} : vector<8x1xi32>
    %21 = vector.broadcast %19 : i32 to vector<8x1xi32>
    %22 = arith.addi %21, %20 : vector<8x1xi32>
    %c13_i32 = arith.constant 13 : i32
    %23 = vector.broadcast %c13_i32 : i32 to vector<8x1xi32>
    %24 = arith.cmpi slt, %22, %23 : vector<8x1xi32>
    %cst = arith.constant 0.000000e+00 : f32
    %25 = vector.shape_cast %24 : vector<8x1xi1> to vector<8x1xi1>
    %26 = vector.broadcast %25 : vector<8x1xi1> to vector<8x48xi1>
    %27 = vector.broadcast %cst : f32 to vector<8x48xf32>
    %28 = arith.select %26, %16, %27 : vector<8x48xi1>, vector<8x48xf32>
    %cst_12 = arith.constant 0.000000e+00 : f32
    %29 = vector.shape_cast %24 : vector<8x1xi1> to vector<8x1xi1>
    %30 = vector.broadcast %29 : vector<8x1xi1> to vector<8x64xi1>
    %31 = vector.broadcast %cst_12 : f32 to vector<8x64xf32>
    %32 = arith.select %30, %18, %31 : vector<8x64xi1>, vector<8x64xf32>
    %c0_13 = arith.constant 0 : index
    %c0_14 = arith.constant 0 : index
    %33 = vector.load %arg7[%c0_13, %c0_14] : memref<1x1xf32, #tpu.memory_space<vmem>>, vector<1x1xf32>
    %34 = vector.shape_cast %28 : vector<8x48xf32> to vector<1x8x48xf32>
    %cst_15 = arith.constant dense<0.000000e+00> : vector<1xf32>
    %35 = vector.multi_reduction <add>, %34, %cst_15 [1, 2] : vector<1x8x48xf32> to vector<1xf32>
    %36 = vector.shape_cast %35 : vector<1xf32> to vector<1x1x1xf32>
    %37 = vector.extract %36[0, 0, 0] : f32 from vector<1x1x1xf32>
    %38 = vector.shape_cast %32 : vector<8x64xf32> to vector<1x8x64xf32>
    %cst_16 = arith.constant dense<0.000000e+00> : vector<1xf32>
    %39 = vector.multi_reduction <add>, %38, %cst_16 [1, 2] : vector<1x8x64xf32> to vector<1xf32>
    %40 = vector.shape_cast %39 : vector<1xf32> to vector<1x1x1xf32>
    %41 = vector.extract %40[0, 0, 0] : f32 from vector<1x1x1xf32>
    %42 = arith.addf %37, %41 : f32
    %43 = vector.broadcast %42 : f32 to vector<1x1xf32>
    %44 = arith.addf %33, %43 : vector<1x1xf32>
    %c0_17 = arith.constant 0 : index
    %c0_18 = arith.constant 0 : index
    %45 = vector.load %arg7[%c0_17, %c0_18] : memref<1x1xf32, #tpu.memory_space<vmem>>, vector<1x1xf32>
    tpu.vector_store %arg7[%c0_17, %c0_18], %44 {strides = array<i32>} : memref<1x1xf32, #tpu.memory_space<vmem>>, vector<1x1xf32>,
    %c1_i32 = arith.constant 1 : i32
    %46 = arith.cmpi eq, %arg0, %c1_i32 : i32
    %47 = arith.extui %46 : i1 to i32
    %c0_i32_19 = arith.constant 0 : i32
    %48 = arith.cmpi ne, %47, %c0_i32_19 : i32
    scf.if %48 {
      %c0_20 = arith.constant 0 : index
      %c0_21 = arith.constant 0 : index
      %49 = vector.load %arg7[%c0_20, %c0_21] : memref<1x1xf32, #tpu.memory_space<vmem>>, vector<1x1xf32>
      %cst_22 = arith.constant 0.0769230798 : f32
      %50 = vector.broadcast %cst_22 : f32 to vector<1x1xf32>
      %51 = arith.mulf %49, %50 : vector<1x1xf32>
      %c0_23 = arith.constant 0 : index
      %c0_24 = arith.constant 0 : index
      %52 = vector.load %arg7[%c0_23, %c0_24] : memref<1x1xf32, #tpu.memory_space<vmem>>, vector<1x1xf32>
      tpu.vector_store %arg7[%c0_23, %c0_24], %51 {strides = array<i32>} : memref<1x1xf32, #tpu.memory_space<vmem>>, vector<1x1xf32>,
    } else {
    }
    return
  }
  func.func @transform_0(%arg0: i32) -> (i32, i32) {
    %c0_i32 = arith.constant 0 : i32
    %c0_i32_0 = arith.constant 0 : i32
    return %arg0, %c0_i32 : i32, i32
  }
  func.func @transform_1(%arg0: i32) -> (i32, i32) {
    %c0_i32 = arith.constant 0 : i32
    %c0_i32_0 = arith.constant 0 : i32
    return %arg0, %c0_i32 : i32, i32
  }
  func.func @transform_2(%arg0: i32) -> (i32, i32) {
    %c0_i32 = arith.constant 0 : i32
    %c0_i32_0 = arith.constant 0 : i32
    return %arg0, %c0_i32 : i32, i32
  }
  func.func @transform_3(%arg0: i32) -> (i32, i32) {
    %c0_i32 = arith.constant 0 : i32
    %c0_i32_0 = arith.constant 0 : i32
    return %arg0, %c0_i32 : i32, i32
  }
  func.func @transform_4(%arg0: i32) -> (i32, i32) {
    %c0_i32 = arith.constant 0 : i32
    %c0_i32_0 = arith.constant 0 : i32
    return %arg0, %c0_i32 : i32, i32
  }
  func.func @transform_5(%arg0: i32) -> (i32, i32) {
    %c0_i32 = arith.constant 0 : i32
    %c0_i32_0 = arith.constant 0 : i32
    return %arg0, %c0_i32 : i32, i32
  }
  func.func @transform_6(%arg0: i32) -> (i32, i32) {
    %c0_i32 = arith.constant 0 : i32
    %c0_i32_0 = arith.constant 0 : i32
    %c0_i32_1 = arith.constant 0 : i32
    return %c0_i32, %c0_i32_0 : i32, i32
  }
}

</mosaic_0001>

<llo_original>
// kernel: tpu_custom_call.1
$region0: #{tpu_custom_call.1}
  #allocation0 [shape = 'u32[]', space=smem, size = 0x4, offset = 0x4, fixed_abs, tag = 'smem constant byte address 0x4 - core index']
  #allocation1 [shape = 'u32[144,128]{1,0:T(1,128)}', space=vmem, size = 0x12000, scoped, tag = 'internal scratch']
  %s0 = inlined_call_operand.hbm [shape: f32[13,64], index: 0, kind: input, shape index: {}]
  %s1 = inlined_call_operand.hbm [shape: f32[13,64], index: 1, kind: input, shape index: {}]
  %s2 = inlined_call_operand.hbm [shape: f32[13,48], index: 2, kind: input, shape index: {}]
  %s3 = inlined_call_operand.hbm [shape: f32[13,48], index: 3, kind: input, shape index: {}]
  %s4 = inlined_call_operand.hbm [shape: f32[13,48], index: 4, kind: input, shape index: {}]
  %s5 = inlined_call_operand.vmem [shape: f32[13,64], index: 5, kind: input, shape index: {}]
  %s6 = inlined_call_operand.hbm [shape: f32[1,1], index: 6, kind: output, shape index: {}]
  %s7 = sld [smem:[#allocation0]]
  $region85: #{tpu_custom_call.1} parent=0
    _
  %s9 = ssub.s32 1, %s7
  %s10 = scalar_select 0, %s9, %s7
  $region1: #{tpu_custom_call.1} parent=0
    #allocation2 [shape = 'u8[8192]{0}', space=vmem, size = 0x2000, scoped, tag = 'input window, operand 0']
    #allocation3 [shape = 's32[2]{0}', space=sflag, size = 0x8, scoped, tag = 'scoped memory for tpu_custom_call.1']
    #allocation4 [shape = 's32[2]{0}', space=sflag, size = 0x8, scoped, tag = 'scoped memory for tpu_custom_call.1']
    #allocation5 [shape = 'u8[8192]{0}', space=vmem, size = 0x2000, scoped, tag = 'input window, operand 1']
    #allocation6 [shape = 's32[2]{0}', space=sflag, size = 0x8, scoped, tag = 'scoped memory for tpu_custom_call.1']
    #allocation7 [shape = 'u8[8192]{0}', space=vmem, size = 0x2000, scoped, tag = 'input window, operand 2']
    #allocation8 [shape = 'u8[8192]{0}', space=vmem, size = 0x2000, scoped, tag = 'input window, operand 3']
    #allocation9 [shape = 's32[2]{0}', space=sflag, size = 0x8, scoped, tag = 'scoped memory for tpu_custom_call.1']
    #allocation10 [shape = 'u8[8192]{0}', space=vmem, size = 0x2000, scoped, tag = 'input window, operand 4']
    #allocation11 [shape = 'u8[512]{0}', space=vmem, size = 0x400, scoped, tag = 'output window, operand 0, single buffered']
    %11 = vsyncpa [#allocation3], 0
    %s12 = scalar_lea.sflag [#allocation3], 1
    %13 = vsyncpa %s12, 0
    %14 = vsyncpa [#allocation6], 0
    %s15 = scalar_lea.sflag [#allocation6], 1
    %16 = vsyncpa %s15, 0
    %17 = vsyncpa [#allocation9], 0
    %s18 = scalar_lea.sflag [#allocation9], 1
    %19 = vsyncpa %s18, 0
    %20 = vsyncpa [#allocation4], 0
    loop: start=0, step=1, limit=4
    $region2: #{tpu_custom_call.1} parent=1 // loop_pre_header
      _
    $region3: #{tpu_custom_call.1} parent=1 // loop_header
      %s22 = sphi 0, %s26
      %p23 = scmp.ge.s32.totalorder %s22, 4
      %s32 = sphi 0, %s34
      %s35 = sphi 0, %s32
      %s36 = sphi 0, %s35
      %s52 = sphi 0, %s36
      %s58 = sphi 0, %s60
      %s61 = sphi 0, %s58
      %s62 = sphi 0, %s61
      %s78 = sphi 0, %s62
      %s84 = sphi 0, %s86
      %s87 = sphi 0, %s84
      %s88 = sphi 0, %s87
      %s104 = sphi 0, %s88
      %s110 = sphi 0, %s112
      %s113 = sphi 0, %s110
      %s114 = sphi 0, %s113
      %s130 = sphi 0, %s114
      %s136 = sphi 0, %s138
      %s139 = sphi 0, %s136
      %s140 = sphi 0, %s139
      %s156 = sphi 0, %s140
      %s162 = sphi 0, %s164
      %s165 = sphi 0, %s162
      %s166 = sphi 0, %s165
      %s182 = sphi 0, %s166
      %s186 = sphi 0, %s186
      %s188 = sphi 0, %s186
      %s189 = sphi 0, %s188
      %s203 = sphi 0, %s189
    $region4: #{tpu_custom_call.1} parent=1 // loop_header_branch
      %25 = sbr.rel (%p23) target = $region8
    $region5: #{tpu_custom_call.1} parent=1 // loop_body
      %s27 = ssub.s32 %s22, 1
      %s28 = ssub.s32 %s22, 2
      %s29 = sadd.s32 %s22, 1
      %s30 = ssub.s32 %s22, %s29
      %p31 = scmp.eq.s32.totalorder %s30, 0
      %s33 = sadd.s32 %s32, 1
      %s34 = scalar_select %p31, %s32, %s33
      %p37 = pneg %p31
      %p38 = scmp.eq.s32.totalorder %s22, 1
      %p39 = por %p37, %p38
      %p40 = scmp.ne.s32.totalorder %s32, %s35
      %p41 = scmp.eq.s32.totalorder %s22, 0
      %p42 = por %p40, %p41
      %p43 = scmp.ne.s32.totalorder %s32, %s35
      %p44 = scmp.eq.s32.totalorder %s27, 1
      %p45 = por %p43, %p44
      %p46 = scmp.ne.s32.totalorder %s35, %s36
      %p47 = scmp.eq.s32.totalorder %s27, 0
      %p48 = por %p46, %p47
      %p49 = scmp.ne.s32.totalorder %s35, %s36
      %p50 = scmp.eq.s32.totalorder %s28, 1
      %p51 = por %p49, %p50
      %p53 = scmp.ne.s32.totalorder %s36, %s52
      %p54 = scmp.eq.s32.totalorder %s28, 0
      %p55 = por %p53, %p54
      %s56 = ssub.s32 %s22, %s29
      %p57 = scmp.eq.s32.totalorder %s56, 0
      %s59 = sadd.s32 %s58, 1
      %s60 = scalar_select %p57, %s58, %s59
      %p63 = pneg %p57
      %p64 = scmp.eq.s32.totalorder %s22, 1
      %p65 = por %p63, %p64
      %p66 = scmp.ne.s32.totalorder %s58, %s61
      %p67 = scmp.eq.s32.totalorder %s22, 0
      %p68 = por %p66, %p67
      %p69 = scmp.ne.s32.totalorder %s58, %s61
      %p70 = scmp.eq.s32.totalorder %s27, 1
      %p71 = por %p69, %p70
      %p72 = scmp.ne.s32.totalorder %s61, %s62
      %p73 = scmp.eq.s32.totalorder %s27, 0
      %p74 = por %p72, %p73
      %p75 = scmp.ne.s32.totalorder %s61, %s62
      %p76 = scmp.eq.s32.totalorder %s28, 1
      %p77 = por %p75, %p76
      %p79 = scmp.ne.s32.totalorder %s62, %s78
      %p80 = scmp.eq.s32.totalorder %s28, 0
      %p81 = por %p79, %p80
      %s82 = ssub.s32 %s22, %s29
      %p83 = scmp.eq.s32.totalorder %s82, 0
      %s85 = sadd.s32 %s84, 1
      %s86 = scalar_select %p83, %s84, %s85
      %p89 = pneg %p83
      %p90 = scmp.eq.s32.totalorder %s22, 1
      %p91 = por %p89, %p90
      %p92 = scmp.ne.s32.totalorder %s84, %s87
      %p93 = scmp.eq.s32.totalorder %s22, 0
      %p94 = por %p92, %p93
      %p95 = scmp.ne.s32.totalorder %s84, %s87
      %p96 = scmp.eq.s32.totalorder %s27, 1
      %p97 = por %p95, %p96
      %p98 = scmp.ne.s32.totalorder %s87, %s88
      %p99 = scmp.eq.s32.totalorder %s27, 0
      %p100 = por %p98, %p99
      %p101 = scmp.ne.s32.totalorder %s87, %s88
      %p102 = scmp.eq.s32.totalorder %s28, 1
      %p103 = por %p101, %p102
      %p105 = scmp.ne.s32.totalorder %s88, %s104
      %p106 = scmp.eq.s32.totalorder %s28, 0
      %p107 = por %p105, %p106
      %s108 = ssub.s32 %s22, %s29
      %p109 = scmp.eq.s32.totalorder %s108, 0
      %s111 = sadd.s32 %s110, 1
      %s112 = scalar_select %p109, %s110, %s111
      %p115 = pneg %p109
      %p116 = scmp.eq.s32.totalorder %s22, 1
      %p117 = por %p115, %p116
      %p118 = scmp.ne.s32.totalorder %s110, %s113
      %p119 = scmp.eq.s32.totalorder %s22, 0
      %p120 = por %p118, %p119
      %p121 = scmp.ne.s32.totalorder %s110, %s113
      %p122 = scmp.eq.s32.totalorder %s27, 1
      %p123 = por %p121, %p122
      %p124 = scmp.ne.s32.totalorder %s113, %s114
      %p125 = scmp.eq.s32.totalorder %s27, 0
      %p126 = por %p124, %p125
      %p127 = scmp.ne.s32.totalorder %s113, %s114
      %p128 = scmp.eq.s32.totalorder %s28, 1
      %p129 = por %p127, %p128
      %p131 = scmp.ne.s32.totalorder %s114, %s130
      %p132 = scmp.eq.s32.totalorder %s28, 0
      %p133 = por %p131, %p132
      %s134 = ssub.s32 %s22, %s29
      %p135 = scmp.eq.s32.totalorder %s134, 0
      %s137 = sadd.s32 %s136, 1
      %s138 = scalar_select %p135, %s136, %s137
      %p141 = pneg %p135
      %p142 = scmp.eq.s32.totalorder %s22, 1
      %p143 = por %p141, %p142
      %p144 = scmp.ne.s32.totalorder %s136, %s139
      %p145 = scmp.eq.s32.totalorder %s22, 0
      %p146 = por %p144, %p145
      %p147 = scmp.ne.s32.totalorder %s136, %s139
      %p148 = scmp.eq.s32.totalorder %s27, 1
      %p149 = por %p147, %p148
      %p150 = scmp.ne.s32.totalorder %s139, %s140
      %p151 = scmp.eq.s32.totalorder %s27, 0
      %p152 = por %p150, %p151
      %p153 = scmp.ne.s32.totalorder %s139, %s140
      %p154 = scmp.eq.s32.totalorder %s28, 1
      %p155 = por %p153, %p154
      %p157 = scmp.ne.s32.totalorder %s140, %s156
      %p158 = scmp.eq.s32.totalorder %s28, 0
      %p159 = por %p157, %p158
      %s160 = ssub.s32 %s22, %s29
      %p161 = scmp.eq.s32.totalorder %s160, 0
      %s163 = sadd.s32 %s162, 1
      %s164 = scalar_select %p161, %s162, %s163
      %p167 = pneg %p161
      %p168 = scmp.eq.s32.totalorder %s22, 1
      %p169 = por %p167, %p168
      %p170 = scmp.ne.s32.totalorder %s162, %s165
      %p171 = scmp.eq.s32.totalorder %s22, 0
      %p172 = por %p170, %p171
      %p173 = scmp.ne.s32.totalorder %s162, %s165
      %p174 = scmp.eq.s32.totalorder %s27, 1
      %p175 = por %p173, %p174
      %p176 = scmp.ne.s32.totalorder %s165, %s166
      %p177 = scmp.eq.s32.totalorder %s27, 0
      %p178 = por %p176, %p177
      %p179 = scmp.ne.s32.totalorder %s165, %s166
      %p180 = scmp.eq.s32.totalorder %s28, 1
      %p181 = por %p179, %p180
      %p183 = scmp.ne.s32.totalorder %s166, %s182
      %p184 = scmp.eq.s32.totalorder %s28, 0
      %p185 = por %p183, %p184
      %s187 = sadd.s32 %s186, 1
      %p190 = scmp.eq.s32.totalorder %s22, 1
      %p191 = scmp.ne.s32.totalorder %s186, %s188
      %p192 = scmp.eq.s32.totalorder %s22, 0
      %p193 = por %p191, %p192
      %p194 = scmp.ne.s32.totalorder %s186, %s188
      %p195 = scmp.eq.s32.totalorder %s27, 1
      %p196 = por %p194, %p195
      %p197 = scmp.ne.s32.totalorder %s188, %s189
      %p198 = scmp.eq.s32.totalorder %s27, 0
      %p199 = por %p197, %p198
      %p200 = scmp.ne.s32.totalorder %s188, %s189
      %p201 = scmp.eq.s32.totalorder %s28, 1
      %p202 = por %p200, %p201
      %p204 = scmp.ne.s32.totalorder %s189, %s203
      %p205 = scmp.eq.s32.totalorder %s28, 0
      %p206 = por %p204, %p205
      %p207 = scmp.le.s32.totalorder 1, %s22
      %p208 = scmp.lt.s32.totalorder %s22, 3
      %p209 = pnand %p207, %p208
      %p210 = pneg %p209
      // Predicated region
      $region9: #{tpu_custom_call.1} parent=5 // pred_check
        _
      $region10: #{tpu_custom_call.1} parent=5 // pred_check_branch
        %212 = sbr.rel (%p209) target = $region12
      $region11: #{tpu_custom_call.1} parent=5 // pred_region
        %s213 = ssub.s32 %s22, 1
      $region12: #{tpu_custom_call.1} parent=5 // pred_fallthru
        _
      %p214 = scmp.lt.s32.totalorder %s22, 2
      // Predicated region
      $region13: #{tpu_custom_call.1} parent=5 // pred_check
        %p215 = pneg %p214
      $region14: #{tpu_custom_call.1} parent=5 // pred_check_branch
        %217 = sbr.rel (%p215) target = $region16
      $region15: #{tpu_custom_call.1} parent=5 // pred_region
        // Predicated region
        $region17: #{tpu_custom_call.1} parent=15 // pred_check
          %p218 = pneg %p42
        $region18: #{tpu_custom_call.1} parent=15 // pred_check_branch
          %220 = sbr.rel (%p218) target = $region20
        $region19: #{tpu_custom_call.1} parent=15 // pred_region
          %s221 = sand.u32 %s32, 1
          %s222 = scalar_lea.sflag [#allocation3], %s221
          %s223 = sand.u32 %s32, 1
          %s224 = smul.addr %s223, 8
          %s225 = scalar_lea.vmem [#allocation2], %s224
          %s227 = ssub.s32 128, 128
          %228 = vsyncadd %s222, %s227
          %s229 = smul.addr %s22, 128
          %s230 = scalar_lea.hbm %s0, %s229
          %s232 = sshll.u32 %s225, 4
          %s233 = int_to_ptr.vmem [resolvable:$true] %s232
          %235 = dma.hbm_to_vmem [thread:$0]  %s230, 128, %s233, %s222
        $region20: #{tpu_custom_call.1} parent=15 // pred_fallthru
          _
        // Predicated region
        $region21: #{tpu_custom_call.1} parent=15 // pred_check
          %p236 = pneg %p68
        $region22: #{tpu_custom_call.1} parent=15 // pred_check_branch
          %238 = sbr.rel (%p236) target = $region24
        $region23: #{tpu_custom_call.1} parent=15 // pred_region
          %s239 = sand.u32 %s22, 1
          %s240 = scalar_lea.sflag [#allocation6], %s239
          %s241 = sand.u32 %s58, 1
          %s242 = smul.addr %s241, 8
          %s243 = scalar_lea.vmem [#allocation5], %s242
          %s245 = ssub.s32 128, 128
          %246 = vsyncadd %s240, %s245
          %s247 = smul.addr %s22, 128
          %s248 = scalar_lea.hbm %s1, %s247
          %s250 = sshll.u32 %s243, 4
          %s251 = int_to_ptr.vmem [resolvable:$true] %s250
          %253 = dma.hbm_to_vmem [thread:$0]  %s248, 128, %s251, %s240
        $region24: #{tpu_custom_call.1} parent=15 // pred_fallthru
          _
        // Predicated region
        $region25: #{tpu_custom_call.1} parent=15 // pred_check
          %p254 = pneg %p94
        $region26: #{tpu_custom_call.1} parent=15 // pred_check_branch
          %256 = sbr.rel (%p254) target = $region28
        $region27: #{tpu_custom_call.1} parent=15 // pred_region
          %s257 = sand.u32 %s22, 1
          %s258 = scalar_lea.sflag [#allocation6], %s257
          %s259 = sand.u32 %s84, 1
          %s260 = smul.addr %s259, 8
          %s261 = scalar_lea.vmem [#allocation7], %s260
          %s263 = ssub.s32 128, 128
          %264 = vsyncadd %s258, %s263
          %s265 = smul.addr %s22, 128
          %s266 = scalar_lea.hbm %s2, %s265
          %s268 = sshll.u32 %s261, 4
          %s269 = int_to_ptr.vmem [resolvable:$true] %s268
          %271 = dma.hbm_to_vmem [thread:$0]  %s266, 128, %s269, %s258
        $region28: #{tpu_custom_call.1} parent=15 // pred_fallthru
          _
        // Predicated region
        $region29: #{tpu_custom_call.1} parent=15 // pred_check
          %p272 = pneg %p120
        $region30: #{tpu_custom_call.1} parent=15 // pred_check_branch
          %274 = sbr.rel (%p272) target = $region32
        $region31: #{tpu_custom_call.1} parent=15 // pred_region
          %s275 = sand.u32 %s22, 1
          %s276 = scalar_lea.sflag [#allocation9], %s275
          %s277 = sand.u32 %s110, 1
          %s278 = smul.addr %s277, 8
          %s279 = scalar_lea.vmem [#allocation8], %s278
          %s281 = ssub.s32 128, 128
          %282 = vsyncadd %s276, %s281
          %s283 = smul.addr %s22, 128
          %s284 = scalar_lea.hbm %s3, %s283
          %s286 = sshll.u32 %s279, 4
          %s287 = int_to_ptr.vmem [resolvable:$true] %s286
          %289 = dma.hbm_to_vmem [thread:$0]  %s284, 128, %s287, %s276
        $region32: #{tpu_custom_call.1} parent=15 // pred_fallthru
          _
        // Predicated region
        $region33: #{tpu_custom_call.1} parent=15 // pred_check
          %p290 = pneg %p146
        $region34: #{tpu_custom_call.1} parent=15 // pred_check_branch
          %292 = sbr.rel (%p290) target = $region36
        $region35: #{tpu_custom_call.1} parent=15 // pred_region
          %s293 = sand.u32 %s22, 1
          %s294 = scalar_lea.sflag [#allocation9], %s293
          %s295 = sand.u32 %s136, 1
          %s296 = smul.addr %s295, 8
          %s297 = scalar_lea.vmem [#allocation10], %s296
          %s299 = ssub.s32 128, 128
          %300 = vsyncadd %s294, %s299
          %s301 = smul.addr %s22, 128
          %s302 = scalar_lea.hbm %s4, %s301
          %s304 = sshll.u32 %s297, 4
          %s305 = int_to_ptr.vmem [resolvable:$true] %s304
          %307 = dma.hbm_to_vmem [thread:$0]  %s302, 128, %s305, %s294
        $region36: #{tpu_custom_call.1} parent=15 // pred_fallthru
          _
        // Predicated region
        $region37: #{tpu_custom_call.1} parent=15 // pred_check
          %p308 = pneg %p172
        $region38: #{tpu_custom_call.1} parent=15 // pred_check_branch
          %310 = sbr.rel (%p308) target = $region40
        $region39: #{tpu_custom_call.1} parent=15 // pred_region
          %p311 = scmp.lt.s32.totalorder %s22, 1
          %s312 = scalar_select %p311, %s22, 1
          %s313 = smul.addr %s312, 8
          %s314 = scalar_lea.vmem %s5, %s313
        $region40: #{tpu_custom_call.1} parent=15 // pred_fallthru
          _
      $region16: #{tpu_custom_call.1} parent=5 // pred_fallthru
        _
      %p315 = scmp.le.s32.totalorder 1, %s22
      %p316 = scmp.lt.s32.totalorder %s22, 3
      %p317 = pnand %p315, %p316
      %p318 = pneg %p317
      // Predicated region
      $region41: #{tpu_custom_call.1} parent=5 // pred_check
        _
      $region42: #{tpu_custom_call.1} parent=5 // pred_check_branch
        %320 = sbr.rel (%p317) target = $region44
      $region43: #{tpu_custom_call.1} parent=5 // pred_region
        %s321 = ssub.s32 %s22, 1
        %s322 = sand.u32 %s35, 1
        %s323 = scalar_lea.sflag [#allocation3], %s322
        %s324 = sand.u32 %s35, 1
        %s325 = smul.addr %s324, 8
        %s326 = scalar_lea.vmem [#allocation2], %s325
        // Predicated region
        $region45: #{tpu_custom_call.1} parent=43 // pred_check
          %p327 = pneg %p48
        $region46: #{tpu_custom_call.1} parent=43 // pred_check_branch
          %329 = sbr.rel (%p327) target = $region48
        $region47: #{tpu_custom_call.1} parent=43 // pred_region
          %330 = dma.done %s323, 128
        $region48: #{tpu_custom_call.1} parent=43 // pred_fallthru
          _
        %s331 = sand.u32 %s27, 1
        %s332 = scalar_lea.sflag [#allocation6], %s331
        %s333 = sand.u32 %s61, 1
        %s334 = smul.addr %s333, 8
        %s335 = scalar_lea.vmem [#allocation5], %s334
        // Predicated region
        $region49: #{tpu_custom_call.1} parent=43 // pred_check
          %p336 = pneg %p74
        $region50: #{tpu_custom_call.1} parent=43 // pred_check_branch
          %338 = sbr.rel (%p336) target = $region52
        $region51: #{tpu_custom_call.1} parent=43 // pred_region
          %339 = dma.done %s332, 128
        $region52: #{tpu_custom_call.1} parent=43 // pred_fallthru
          _
        %s340 = sand.u32 %s27, 1
        %s341 = scalar_lea.sflag [#allocation6], %s340
        %s342 = sand.u32 %s87, 1
        %s343 = smul.addr %s342, 8
        %s344 = scalar_lea.vmem [#allocation7], %s343
        // Predicated region
        $region53: #{tpu_custom_call.1} parent=43 // pred_check
          %p345 = pneg %p100
        $region54: #{tpu_custom_call.1} parent=43 // pred_check_branch
          %347 = sbr.rel (%p345) target = $region56
        $region55: #{tpu_custom_call.1} parent=43 // pred_region
          %348 = dma.done %s341, 128
        $region56: #{tpu_custom_call.1} parent=43 // pred_fallthru
          _
        %s349 = sand.u32 %s27, 1
        %s350 = scalar_lea.sflag [#allocation9], %s349
        %s351 = sand.u32 %s113, 1
        %s352 = smul.addr %s351, 8
        %s353 = scalar_lea.vmem [#allocation8], %s352
        // Predicated region
        $region57: #{tpu_custom_call.1} parent=43 // pred_check
          %p354 = pneg %p126
        $region58: #{tpu_custom_call.1} parent=43 // pred_check_branch
          %356 = sbr.rel (%p354) target = $region60
        $region59: #{tpu_custom_call.1} parent=43 // pred_region
          %357 = dma.done %s350, 128
        $region60: #{tpu_custom_call.1} parent=43 // pred_fallthru
          _
        %s358 = sand.u32 %s27, 1
        %s359 = scalar_lea.sflag [#allocation9], %s358
        %s360 = sand.u32 %s139, 1
        %s361 = smul.addr %s360, 8
        %s362 = scalar_lea.vmem [#allocation10], %s361
        // Predicated region
        $region61: #{tpu_custom_call.1} parent=43 // pred_check
          %p363 = pneg %p152
        $region62: #{tpu_custom_call.1} parent=43 // pred_check_branch
          %365 = sbr.rel (%p363) target = $region64
        $region63: #{tpu_custom_call.1} parent=43 // pred_region
          %366 = dma.done %s359, 128
        $region64: #{tpu_custom_call.1} parent=43 // pred_fallthru
          _
        %s367 = sand.u32 %s35, 1
        %s368 = scalar_lea.sflag [#allocation3], %s367
        %s369 = sand.u32 %s35, 1
        %s370 = smul.addr %s369, 8
        %s371 = scalar_lea.vmem [#allocation2], %s370
        %p372 = pneg %p48
        %p373 = pneg %p45
        %s374 = sand.u32 %s27, 1
        %s375 = scalar_lea.sflag [#allocation6], %s374
        %s376 = sand.u32 %s61, 1
        %s377 = smul.addr %s376, 8
        %s378 = scalar_lea.vmem [#allocation5], %s377
        %p379 = pneg %p74
        %p380 = pneg %p71
        %s381 = sand.u32 %s27, 1
        %s382 = scalar_lea.sflag [#allocation6], %s381
        %s383 = sand.u32 %s87, 1
        %s384 = smul.addr %s383, 8
        %s385 = scalar_lea.vmem [#allocation7], %s384
        %p386 = pneg %p100
        %p387 = pneg %p97
        %s388 = sand.u32 %s27, 1
        %s389 = scalar_lea.sflag [#allocation9], %s388
        %s390 = sand.u32 %s113, 1
        %s391 = smul.addr %s390, 8
        %s392 = scalar_lea.vmem [#allocation8], %s391
        %p393 = pneg %p126
        %p394 = pneg %p123
        %s395 = sand.u32 %s27, 1
        %s396 = scalar_lea.sflag [#allocation9], %s395
        %s397 = sand.u32 %s139, 1
        %s398 = smul.addr %s397, 8
        %s399 = scalar_lea.vmem [#allocation10], %s398
        %p400 = pneg %p152
        %p401 = pneg %p149
        %p402 = scmp.lt.s32.totalorder %s27, 1
        %s403 = scalar_select %p402, %s27, 1
        %s404 = smul.addr %s403, 8
        %s405 = scalar_lea.vmem %s5, %s404
        %p406 = pneg %p178
        %p407 = pneg %p175
        %p408 = pneg %p199
        %p409 = pneg %p196
        %p410 = scmp.lt.s32.totalorder %s27, 1
        %s411 = scalar_select %p410, %s27, 1
        %s412 = smul.addr %s411, 8
        %s413 = scalar_lea.vmem %s5, %s412
        %p414 = scmp.eq.s32.totalorder %s27, 0
        // Predicated region
        $region65: #{tpu_custom_call.1} parent=43 // pred_check
          %p415 = pneg %p414
        $region66: #{tpu_custom_call.1} parent=43 // pred_check_branch
          %417 = sbr.rel (%p415) target = $region68
        $region67: #{tpu_custom_call.1} parent=43 // pred_region
          %vm418 = vcmask 0
          %419 = vst.msk [vmem:[#allocation11] sm:$0x1] %vm418, 0.0
        $region68: #{tpu_custom_call.1} parent=43 // pred_fallthru
          _
        %v420 = vld [vmem:[%s353] sm:$0xff]
        %v421 = vld [vmem:[%s344] sm:$0xff]
        %v422 = vld [vmem:[%s335] sm:$0xff]
        %v423 = vld [vmem:[%s326] sm:$0xff]
        %v424 = vld [vmem:[%s362] sm:$0xff]
        %v425 = vld [vmem:[%s413] sm:$0xff]
        %v426 = vsub.f32 %v420, %v421
        %v427 = vsub.f32 %v422, %v423
        %v428 = vmul.f32 %v424, %v424
        %v429 = vrcp.pop %v428
        %v430 = vmul.f32 %v425, %v425
        %v431 = vrcp.pop %v430
        %v432 = vmul.f32 %v426, %v426
        %v433 = vmul.f32 %v432, %v429
        %v434 = vmul.f32 %v427, %v427
        %v435 = vmul.f32 %v434, %v431
        %s436 = smul.u32 %s27, 8
        %v437 = vlaneseq
        %v438 = vshrl.u32 %v437, 7
        %v439 = vstv %s436
        %v440 = vadd.s32 %v439, %v438
        %vm441 = vcmp.lt.s32.totalorder %v440, 13
        %v442 = vsel %vm441, 1, 0
        %vm443 = vcmp.eq.s32.totalorder %v442, 1
        %v444 = vsel %vm443, %v433, 0.0
        %v445 = vsel %vm443, %v435, 0.0
        %v446 = vld [vmem:[#allocation11] sm:$0x1]
        %vm447 = vcmask 392192
        %v448 = vsel %vm447, %v444, 0.0
        %449 = vadd.xlane.f32.xlu0 %v448
        %v450 = vpop.xlane.xlu0 %449
        %v451 = vrot.slane %v450, 4
        %v452 = vadd.f32 %v450, %v451
        %v453 = vrot.slane %v452, 2
        %v454 = vadd.f32 %v452, %v453
        %v455 = vrot.slane %v454, 1
        %v456 = vadd.f32 %v454, %v455
        %s457 = vtos %v456
        %vm458 = vcmask 523264
        %v459 = vsel %vm458, %v445, 0.0
        %460 = vadd.xlane.f32.xlu0 %v459
        %v461 = vpop.xlane.xlu0 %460
        %v462 = vrot.slane %v461, 4
        %v463 = vadd.f32 %v461, %v462
        %v464 = vrot.slane %v463, 2
        %v465 = vadd.f32 %v463, %v464
        %v466 = vrot.slane %v465, 1
        %v467 = vadd.f32 %v465, %v466
        %s468 = vtos %v467
        %s469 = sadd.f32 %s457, %s468
        %v470 = vstv %s469
        %v471 = vadd.f32 %v446, %v470
        %vm472 = vcmask 0
        %473 = vst.msk [vmem:[#allocation11] sm:$0x1] %vm472, %v471
        %p474 = scmp.eq.s32.totalorder %s27, 1
        // Predicated region
        $region69: #{tpu_custom_call.1} parent=43 // pred_check
          %p475 = pneg %p474
        $region70: #{tpu_custom_call.1} parent=43 // pred_check_branch
          %477 = sbr.rel (%p475) target = $region72
        $region71: #{tpu_custom_call.1} parent=43 // pred_region
          %v478 = vld [vmem:[#allocation11] sm:$0x1]
          %v479 = vmul.f32 %v478, 0.07692308
          %480 = vst.msk [vmem:[#allocation11] sm:$0x1] %vm472, %v479
        $region72: #{tpu_custom_call.1} parent=43 // pred_fallthru
          _
        // Predicated region
        $region73: #{tpu_custom_call.1} parent=43 // pred_check
          %p481 = pneg %p196
        $region74: #{tpu_custom_call.1} parent=43 // pred_check_branch
          %483 = sbr.rel (%p481) target = $region76
        $region75: #{tpu_custom_call.1} parent=43 // pred_region
          %s485 = ssub.s32 16, 16
          %486 = vsyncadd [#allocation4], %s485
          %s488 = sshll.u32 [#allocation11], 4
          %s489 = int_to_ptr.vmem [resolvable:$true] %s488
          %491 = dma.vmem_to_hbm [thread:$0]  %s489, 16, %s6, [#allocation4]
        $region76: #{tpu_custom_call.1} parent=43 // pred_fallthru
          _
        // Predicated region
        $region77: #{tpu_custom_call.1} parent=43 // pred_check
          %p492 = pneg %p196
        $region78: #{tpu_custom_call.1} parent=43 // pred_check_branch
          %494 = sbr.rel (%p492) target = $region80
        $region79: #{tpu_custom_call.1} parent=43 // pred_region
          %495 = dma.done [#allocation4], 16
        $region80: #{tpu_custom_call.1} parent=43 // pred_fallthru
          _
      $region44: #{tpu_custom_call.1} parent=5 // pred_fallthru
        _
      %p496 = scmp.le.s32.totalorder 2, %s22
      // Predicated region
      $region81: #{tpu_custom_call.1} parent=5 // pred_check
        %p497 = pneg %p496
      $region82: #{tpu_custom_call.1} parent=5 // pred_check_branch
        %499 = sbr.rel (%p497) target = $region84
      $region83: #{tpu_custom_call.1} parent=5 // pred_region
        %s500 = ssub.s32 %s22, 2
      $region84: #{tpu_custom_call.1} parent=5 // pred_fallthru
        _
    $region6: #{tpu_custom_call.1} parent=1 // loop_footer
      %s26 = sadd.s32 1, %s22
    $region7: #{tpu_custom_call.1} parent=1 // loop_footer_branch
      %21 = sbr.rel target = $region3
    $region8: #{tpu_custom_call.1} parent=1 // loop_exit
      _
    %501 = vsyncpa [#allocation3], 1
    %s502 = scalar_lea.sflag [#allocation3], 1
    %503 = vsyncpa %s502, 1
    %504 = vsyncpa [#allocation6], 1
    %s505 = scalar_lea.sflag [#allocation6], 1
    %506 = vsyncpa %s505, 1
    %507 = vsyncpa [#allocation9], 1
    %s508 = scalar_lea.sflag [#allocation9], 1
    %509 = vsyncpa %s508, 1
    %510 = vsyncpa [#allocation4], 1
    %s511 = scalar_lea.sflag [#allocation4], 1
    %512 = vsyncpa %s511, 1

</llo_original>
